<compile_context>
chip_gen: v5e
topology: v5e:2x2
jax: 0.10.0
libtpu: 0.0.40
codegen_flags: <defaults>
</compile_context>

<pallas_src>
import functools

import jax
import jax.numpy as jnp
from jax.experimental import pallas as pl
from jax.experimental.pallas import tpu as pltpu

LANE = 128      # TPU lane width
SUBLANE = 8     # TPU sublane width


def _round_up(n, m):
    return ((n + m - 1) // m) * m


def mlp_kernel(x_ref, w1_ref, b1_ref, w2_ref, b2_ref, o_ref, *, use_bf16):
    # Fused Linear -> ReLU -> Linear on one (TB, D) batch tile.
    # bf16 MXU operands (f32 accumulation); bias-add + ReLU stay f32 on the VPU.
    x = x_ref[...]
    if use_bf16:
        x = x.astype(jnp.bfloat16)                        # no-op if x is bf16
    h = jnp.dot(x, w1_ref[...], preferred_element_type=jnp.float32)
    h = jnp.maximum(h + b1_ref[...], 0.0)                 # (TB, H), f32
    if use_bf16:
        h = h.astype(jnp.bfloat16)
    y = jnp.dot(h, w2_ref[...], preferred_element_type=jnp.float32)
    o_ref[...] = (y + b2_ref[...]).astype(o_ref.dtype)    # (TB, C_pad)


def mlp_classifier_forward(x, w1, b1, w2, b2, *, tb=256,
                           out_dtype=jnp.float32, use_bf16=True,
                           return_padded=False):
    """x: (B, D); w1: (D, H); b1: (1, H); w2: (H, C); b2: (1, C) -> (B, C).

    tb:        max batch tile (256 suits v6e/v7x; automatically shrunk to
               round_up(B, 8) for small batches).
    out_dtype: logits dtype (bf16 halves the output HBM stream when acceptable).
    use_bf16:  bf16 matmul operands (f32 accumulation).  False = strict f32.
    return_padded: return the lane-dense (B_pad, C_pad) slab instead of (B, C).
    """
    B, D = x.shape
    H = w1.shape[1]
    C = w2.shape[1]

    # Lane-dense output: pad class dim to a multiple of 128 (zero columns).
    C_pad = _round_up(max(C, LANE), LANE)
    # Small-batch fix: never pad B past the next multiple of 8.
    tb_eff = max(SUBLANE, min(tb, _round_up(B, SUBLANE)))
    B_pad = _round_up(B, tb_eff)

    x_p = x if B_pad == B else jnp.pad(x, ((0, B_pad - B), (0, 0)))
    w2_p = w2 if C_pad == C else jnp.pad(w2, ((0, 0), (0, C_pad - C)))
    b2_p = b2 if C_pad == C else jnp.pad(b2, ((0, 0), (0, C_pad - C)))

    # bf16 weights halve HBM->VMEM bytes; accumulation stays f32 in-kernel.
    w_dtype = jnp.bfloat16 if use_bf16 else jnp.float32
    w1_c = w1.astype(w_dtype)
    w2_c = w2_p.astype(w_dtype)

    grid = (B_pad // tb_eff,)

    x_bytes = jnp.dtype(x_p.dtype).itemsize
    w_bytes = jnp.dtype(w_dtype).itemsize
    o_bytes = jnp.dtype(out_dtype).itemsize

    # VMEM footprint: resident weights/biases (single-buffered) + double-
    # buffered streamed x/out tiles; 2x margin, clamped to [4 MiB, 48 MiB].
    resident = (D * H + H * C_pad) * w_bytes + (H + C_pad) * 4
    streamed = 2 * tb_eff * (D * x_bytes + C_pad * o_bytes)
    vmem_limit = int(min(48 * 1024 * 1024,
                         max(4 * 1024 * 1024, 2 * (resident + streamed))))

    flops = 2 * B_pad * (D * H + H * C_pad)
    bytes_accessed = (x_p.size * x_bytes
                      + w1_c.size * w_bytes + b1.size * 4
                      + w2_c.size * w_bytes + b2_p.size * 4
                      + B_pad * C_pad * o_bytes)

    kernel = functools.partial(mlp_kernel, use_bf16=use_bf16)

    out = pl.pallas_call(
        kernel,
        out_shape=jax.ShapeDtypeStruct((B_pad, C_pad), out_dtype),
        grid=grid,
        in_specs=[
            # x: tiled over batch, auto double-buffered.
            pl.BlockSpec((tb_eff, D), lambda i: (i, 0)),
            # Weights / biases: VMEM-resident, constant index_map -> single buffer.
            pl.BlockSpec((D, H), lambda i: (0, 0), pipeline_mode=pl.Buffered(1)),
            pl.BlockSpec((1, H), lambda i: (0, 0), pipeline_mode=pl.Buffered(1)),
            pl.BlockSpec((H, C_pad), lambda i: (0, 0), pipeline_mode=pl.Buffered(1)),
            pl.BlockSpec((1, C_pad), lambda i: (0, 0), pipeline_mode=pl.Buffered(1)),
        ],
        out_specs=pl.BlockSpec((tb_eff, C_pad), lambda i: (i, 0)),
        compiler_params=pltpu.CompilerParams(
            dimension_semantics=("parallel",),   # shard batch over TCs (v7x)
            vmem_limit_bytes=vmem_limit,
        ),
        cost_estimate=pl.CostEstimate(
            flops=flops, transcendentals=0, bytes_accessed=bytes_accessed),
    )(x_p, w1_c, b1, w2_c, b2_p)

    if return_padded:
        return out                      # lane-dense (B_pad, C_pad) slab
    # Strip batch padding and padded (zero-weight) logit columns.
    return out[:B, :C]


def init_params(key, input_dim, hidden_dim, num_classes):
    """Deterministic init mimicking torch.nn.Linear (uniform +/- 1/sqrt(fan_in))."""
    k1, k2, k3, k4 = jax.random.split(key, 4)
    bound1 = 1.0 / jnp.sqrt(input_dim)
    bound2 = 1.0 / jnp.sqrt(hidden_dim)
    # Stored as (in, out) == transpose of PyTorch's (out, in) weight layout.
    w1 = jax.random.uniform(k1, (input_dim, hidden_dim), jnp.float32, -bound1, bound1)
    b1 = jax.random.uniform(k2, (1, hidden_dim), jnp.float32, -bound1, bound1)
    w2 = jax.random.uniform(k3, (hidden_dim, num_classes), jnp.float32, -bound2, bound2)
    b2 = jax.random.uniform(k4, (1, num_classes), jnp.float32, -bound2, bound2)
    return w1, b1, w2, b2


if __name__ == "__main__":
    # Shapes consistent with MLPClassifier(input_dim, num_classes=10, hidden_dim=128)
    batch = 8
    input_dim = 64
    hidden_dim = 128
    num_classes = 10

    key = jax.random.PRNGKey(0)
    kx, kp = jax.random.split(key)
    x = jax.random.normal(kx, (batch, input_dim), jnp.float32)
    w1, b1, w2, b2 = init_params(kp, input_dim, hidden_dim, num_classes)

    # Pure-JAX f32 reference of the same forward-pass semantics.
    ref = jnp.maximum(x @ w1 + b1, 0.0) @ w2 + b2

    # Default (bf16 MXU operands, f32 accumulation) path.
    out = mlp_classifier_forward(x, w1, b1, w2, b2)
    jax.block_until_ready(out)
    assert out.shape == (batch, num_classes)
    assert jnp.allclose(out, ref, atol=2e-2, rtol=2e-2), \
        float(jnp.max(jnp.abs(out - ref)))

    # Strict f32-operand path (parity flag from the review).
    out_f32 = mlp_classifier_forward(x, w1, b1, w2, b2, use_bf16=False)
    jax.block_until_ready(out_f32)
    assert jnp.allclose(out_f32, ref, atol=1e-3, rtol=1e-3), \
        float(jnp.max(jnp.abs(out_f32 - ref)))

    print("KERNEL_OK")
</pallas_src>

<mosaic_0001>
module attributes {stable_mosaic.version = 11 : i64} {
  func.func @mlp_kernel(%arg0: i32, %arg1: memref<8x64xf32, #tpu.memory_space<vmem>>, %arg2: memref<64x128xbf16, #tpu.memory_space<vmem>>, %arg3: memref<1x128xf32, #tpu.memory_space<vmem>>, %arg4: memref<128x128xbf16, #tpu.memory_space<vmem>>, %arg5: memref<1x128xf32, #tpu.memory_space<vmem>>, %arg6: memref<8x128xf32, #tpu.memory_space<vmem>>) attributes {dimension_semantics = [#tpu.dimension_semantics<parallel>], iteration_bounds = array<i64: 1>, scalar_prefetch = 0 : i64, scratch_operands = 0 : i64, tpu.core_type = #tpu.core_type<tc>, window_params = [{transform_indices = @transform_0, window_bounds = array<i64: 8, 64>}, {pipeline_mode = #tpu.pipeline_mode<synchronous>, transform_indices = @transform_1, window_bounds = array<i64: 64, 128>}, {pipeline_mode = #tpu.pipeline_mode<synchronous>, transform_indices = @transform_2, window_bounds = array<i64: 1, 128>}, {pipeline_mode = #tpu.pipeline_mode<synchronous>, transform_indices = @transform_3, window_bounds = array<i64: 128, 128>}, {pipeline_mode = #tpu.pipeline_mode<synchronous>, transform_indices = @transform_4, window_bounds = array<i64: 1, 128>}, {transform_indices = @transform_5, window_bounds = array<i64: 8, 128>}]} {
    %c0 = arith.constant 0 : index
    %c0_0 = arith.constant 0 : index
    %0 = vector.load %arg1[%c0, %c0_0] : memref<8x64xf32, #tpu.memory_space<vmem>>, vector<8x64xf32>
    %1 = arith.truncf %0 : vector<8x64xf32> to vector<8x64xbf16>
    %c0_1 = arith.constant 0 : index
    %c0_2 = arith.constant 0 : index
    %2 = vector.load %arg2[%c0_1, %c0_2] : memref<64x128xbf16, #tpu.memory_space<vmem>>, vector<64x128xbf16>
    %cst = arith.constant dense<0.000000e+00> : vector<8x128xf32>
    %3 = tpu.matmul %1, %2, %cst {dimension_numbers = #tpu.dot_dimension_numbers<[1], [0], [0], [1], [0, 0, 1, 1], [], []>} : vector<8x64xbf16>, vector<64x128xbf16>, vector<8x128xf32> -> vector<8x128xf32>
    %c0_3 = arith.constant 0 : index
    %c0_4 = arith.constant 0 : index
    %4 = vector.load %arg3[%c0_3, %c0_4] : memref<1x128xf32, #tpu.memory_space<vmem>>, vector<1x128xf32>
    %5 = vector.broadcast %4 : vector<1x128xf32> to vector<8x128xf32>
    %6 = arith.addf %3, %5 : vector<8x128xf32>
    %cst_5 = arith.constant 0.000000e+00 : f32
    %7 = vector.broadcast %cst_5 : f32 to vector<8x128xf32>
    %8 = arith.maximumf %6, %7 : vector<8x128xf32>
    %9 = arith.truncf %8 : vector<8x128xf32> to vector<8x128xbf16>
    %c0_6 = arith.constant 0 : index
    %c0_7 = arith.constant 0 : index
    %10 = vector.load %arg4[%c0_6, %c0_7] : memref<128x128xbf16, #tpu.memory_space<vmem>>, vector<128x128xbf16>
    %cst_8 = arith.constant dense<0.000000e+00> : vector<8x128xf32>
    %11 = tpu.matmul %9, %10, %cst_8 {dimension_numbers = #tpu.dot_dimension_numbers<[1], [0], [0], [1], [0, 0, 1, 1], [], []>} : vector<8x128xbf16>, vector<128x128xbf16>, vector<8x128xf32> -> vector<8x128xf32>
    %c0_9 = arith.constant 0 : index
    %c0_10 = arith.constant 0 : index
    %12 = vector.load %arg5[%c0_9, %c0_10] : memref<1x128xf32, #tpu.memory_space<vmem>>, vector<1x128xf32>
    %13 = vector.broadcast %12 : vector<1x128xf32> to vector<8x128xf32>
    %14 = arith.addf %11, %13 : vector<8x128xf32>
    %c0_11 = arith.constant 0 : index
    %c0_12 = arith.constant 0 : index
    %15 = vector.load %arg6[%c0_11, %c0_12] : memref<8x128xf32, #tpu.memory_space<vmem>>, vector<8x128xf32>
    tpu.vector_store %arg6[%c0_11, %c0_12], %14 {strides = array<i32>} : memref<8x128xf32, #tpu.memory_space<vmem>>, vector<8x128xf32>,
    return
  }
  func.func @transform_0(%arg0: i32) -> (i32, i32) {
    %c0_i32 = arith.constant 0 : i32
    %c0_i32_0 = arith.constant 0 : i32
    return %arg0, %c0_i32 : i32, i32
  }
  func.func @transform_1(%arg0: i32) -> (i32, i32) {
    %c0_i32 = arith.constant 0 : i32
    %c0_i32_0 = arith.constant 0 : i32
    %c0_i32_1 = arith.constant 0 : i32
    return %c0_i32, %c0_i32_0 : i32, i32
  }
  func.func @transform_2(%arg0: i32) -> (i32, i32) {
    %c0_i32 = arith.constant 0 : i32
    %c0_i32_0 = arith.constant 0 : i32
    %c0_i32_1 = arith.constant 0 : i32
    return %c0_i32, %c0_i32_0 : i32, i32
  }
  func.func @transform_3(%arg0: i32) -> (i32, i32) {
    %c0_i32 = arith.constant 0 : i32
    %c0_i32_0 = arith.constant 0 : i32
    %c0_i32_1 = arith.constant 0 : i32
    return %c0_i32, %c0_i32_0 : i32, i32
  }
  func.func @transform_4(%arg0: i32) -> (i32, i32) {
    %c0_i32 = arith.constant 0 : i32
    %c0_i32_0 = arith.constant 0 : i32
    %c0_i32_1 = arith.constant 0 : i32
    return %c0_i32, %c0_i32_0 : i32, i32
  }
  func.func @transform_5(%arg0: i32) -> (i32, i32) {
    %c0_i32 = arith.constant 0 : i32
    %c0_i32_0 = arith.constant 0 : i32
    return %arg0, %c0_i32 : i32, i32
  }
}

</mosaic_0001>

<llo_original>
// kernel: tpu_custom_call.1
$region0: #{tpu_custom_call.1}
  #allocation0 [shape = 'u32[]', space=smem, size = 0x4, offset = 0x4, fixed_abs, tag = 'smem constant byte address 0x4 - core index']
  #allocation1 [shape = 'u32[72,128]{1,0:T(1,128)}', space=vmem, size = 0x9000, scoped, tag = 'internal scratch']
  %s0 = inlined_call_operand.hbm [shape: f32[8,64], index: 0, kind: input, shape index: {}]
  %s1 = inlined_call_operand.hbm [shape: bf16[64,128], index: 1, kind: input, shape index: {}]
  %s2 = inlined_call_operand.vmem [shape: f32[1,128], index: 2, kind: input, shape index: {}]
  %s3 = inlined_call_operand.hbm [shape: bf16[128,128], index: 3, kind: input, shape index: {}]
  %s4 = inlined_call_operand.vmem [shape: f32[1,128], index: 4, kind: input, shape index: {}]
  %s5 = inlined_call_operand.hbm [shape: f32[8,128], index: 5, kind: output, shape index: {}]
  %s6 = sld [smem:[#allocation0]]
  $region42: #{tpu_custom_call.1} parent=0
    _
  %s8 = ssub.s32 1, %s6
  %s9 = scalar_select 0, %s8, %s6
  $region1: #{tpu_custom_call.1} parent=0
    #allocation2 [shape = 'u8[4096]{0}', space=vmem, size = 0x1000, scoped, tag = 'input window, operand 0, single buffered']
    #allocation3 [shape = 's32[1]{0}', space=sflag, size = 0x4, scoped, tag = 'scoped memory for tpu_custom_call.1']
    #allocation4 [shape = 's32[1]{0}', space=sflag, size = 0x4, scoped, tag = 'scoped memory for tpu_custom_call.1']
    #allocation5 [shape = 'u8[16384]{0}', space=vmem, size = 0x4000, scoped, tag = 'input window, operand 1, single buffered']
    #allocation6 [shape = 's32[1]{0}', space=sflag, size = 0x4, scoped, tag = 'scoped memory for tpu_custom_call.1']
    #allocation7 [shape = 'u8[32768]{0}', space=vmem, size = 0x8000, scoped, tag = 'input window, operand 3, single buffered']
    #allocation8 [shape = 'u8[4096]{0}', space=vmem, size = 0x1000, scoped, tag = 'output window, operand 0, single buffered']
    %10 = vsyncpa [#allocation3], 0
    %11 = vsyncpa [#allocation6], 0
    %12 = vsyncpa [#allocation4], 0
    // Predicated region
    $region2: #{tpu_custom_call.1} parent=1 // pred_check
      _
    $region3: #{tpu_custom_call.1} parent=1 // pred_check_branch
      %14 = sbr.rel (0) target = $region5
    $region4: #{tpu_custom_call.1} parent=1 // pred_region
      %16 = vsyncadd [#allocation3], 0
      %s18 = sshll.u32 %s0, 4
      %s19 = int_to_ptr.hbm [resolvable:$true] %s18
      %s20 = sshll.u32 [#allocation2], 4
      %s21 = int_to_ptr.vmem [resolvable:$true] %s20
      %23 = dma.hbm_to_vmem [thread:$0]  %s19, 128, %s21, [#allocation3]
    $region5: #{tpu_custom_call.1} parent=1 // pred_fallthru
      _
    // Predicated region
    $region6: #{tpu_custom_call.1} parent=1 // pred_check
      _
    $region7: #{tpu_custom_call.1} parent=1 // pred_check_branch
      %25 = sbr.rel (0) target = $region9
    $region8: #{tpu_custom_call.1} parent=1 // pred_region
      %27 = vsyncadd [#allocation6], 0
      %s28 = sshll.u32 %s1, 4
      %s29 = int_to_ptr.hbm [resolvable:$true] %s28
      %s30 = sshll.u32 [#allocation5], 4
      %s31 = int_to_ptr.vmem [resolvable:$true] %s30
      %36 = dma.hbm_to_vmem [thread:$0]  %s29, 512, %s31, [#allocation6], 64, 64, 4
    $region9: #{tpu_custom_call.1} parent=1 // pred_fallthru
      _
    // Predicated region
    $region10: #{tpu_custom_call.1} parent=1 // pred_check
      _
    $region11: #{tpu_custom_call.1} parent=1 // pred_check_branch
      %38 = sbr.rel (0) target = $region13
    $region12: #{tpu_custom_call.1} parent=1 // pred_region
      _
    $region13: #{tpu_custom_call.1} parent=1 // pred_fallthru
      _
    // Predicated region
    $region14: #{tpu_custom_call.1} parent=1 // pred_check
      _
    $region15: #{tpu_custom_call.1} parent=1 // pred_check_branch
      %40 = sbr.rel (0) target = $region17
    $region16: #{tpu_custom_call.1} parent=1 // pred_region
      %42 = vsyncadd [#allocation6], 0
      %s43 = sshll.u32 %s3, 4
      %s44 = int_to_ptr.hbm [resolvable:$true] %s43
      %s45 = sshll.u32 [#allocation7], 4
      %s46 = int_to_ptr.vmem [resolvable:$true] %s45
      %51 = dma.hbm_to_vmem [thread:$0]  %s44, 1024, %s46, [#allocation6], 64, 64, 4
    $region17: #{tpu_custom_call.1} parent=1 // pred_fallthru
      _
    // Predicated region
    $region18: #{tpu_custom_call.1} parent=1 // pred_check
      _
    $region19: #{tpu_custom_call.1} parent=1 // pred_check_branch
      %53 = sbr.rel (0) target = $region21
    $region20: #{tpu_custom_call.1} parent=1 // pred_region
      _
    $region21: #{tpu_custom_call.1} parent=1 // pred_fallthru
      _
    // Predicated region
    $region22: #{tpu_custom_call.1} parent=1 // pred_check
      _
    $region23: #{tpu_custom_call.1} parent=1 // pred_check_branch
      %55 = sbr.rel (0) target = $region25
    $region24: #{tpu_custom_call.1} parent=1 // pred_region
      %57 = dma.done [#allocation3], 128
    $region25: #{tpu_custom_call.1} parent=1 // pred_fallthru
      _
    // Predicated region
    $region26: #{tpu_custom_call.1} parent=1 // pred_check
      _
    $region27: #{tpu_custom_call.1} parent=1 // pred_check_branch
      %59 = sbr.rel (0) target = $region29
    $region28: #{tpu_custom_call.1} parent=1 // pred_region
      %61 = dma.done [#allocation6], 512
    $region29: #{tpu_custom_call.1} parent=1 // pred_fallthru
      _
    // Predicated region
    $region30: #{tpu_custom_call.1} parent=1 // pred_check
      _
    $region31: #{tpu_custom_call.1} parent=1 // pred_check_branch
      %63 = sbr.rel (0) target = $region33
    $region32: #{tpu_custom_call.1} parent=1 // pred_region
      %65 = dma.done [#allocation6], 1024
    $region33: #{tpu_custom_call.1} parent=1 // pred_fallthru
      _
    %v67 = vld [vmem:[#allocation2] sm:$0xff]
    %v68 = vpack.c.bf16 %v67, %v67
    %v69 = vld [vmem:[#allocation5] sm:$0xf]
    %v70 = vld [vmem:[#allocation5 + $0x4] sm:$0xf]
    %v71 = vld [vmem:[#allocation5 + $0x8] sm:$0xf]
    %v72 = vld [vmem:[#allocation5 + $0xc] sm:$0xf]
    %v73 = vld [vmem:[#allocation5 + $0x10] sm:$0xf]
    %v74 = vld [vmem:[#allocation5 + $0x14] sm:$0xf]
    %v75 = vld [vmem:[#allocation5 + $0x18] sm:$0xf]
    %v76 = vld [vmem:[#allocation5 + $0x1c] sm:$0xf]
    %v77 = vld [vmem:[%s2] sm:$0x1]
    %v79 = vperm.slane %v77, 0
    %v89 = vunpack.c.l.b16 %v69
    %v90 = vunpack.c.l.b16 %v70
    %v91 = vunpack.c.l.b16 %v71
    %v92 = vunpack.c.l.b16 %v72
    %v93 = vunpack.c.l.b16 %v73
    %v94 = vunpack.c.l.b16 %v74
    %v95 = vunpack.c.l.b16 %v75
    %v96 = vunpack.c.l.b16 %v76
    %v97 = vpack.c.b16 %v90, %v89
    %v98 = vpack.c.b16 %v92, %v91
    %v99 = vpack.c.b16 %v94, %v93
    %v100 = vpack.c.b16 %v96, %v95
    %vm105 = vcmask 523264
    %v107 = vsel %vm105, %v68, 0
    %109 = vmatpush.bf16.msra.mxu0 0
    %110 = vmatpush.bf16.msra.mxu0 0
    %111 = vmatpush.bf16.msra.mxu0 0
    %112 = vmatpush.bf16.msra.mxu0 0
    %113 = vmatpush.bf16.msra.mxu0 %v100
    %114 = vmatpush.bf16.msra.mxu0 %v99
    %115 = vmatpush.bf16.msra.mxu0 %v98
    %116 = vmatpush.bf16.msra.mxu0 %v97
    %117 = vmatmul.bf16.gmra.mxu0 %v107
    %v118 = vpop.f32.mrf.mxu0
    %v119 = vadd.f32 %v79, %v118
    %v120 = vpop.f32.mrf.mxu0
    %121 = vdwg.mxu0
    %v122 = vmax.f32 %v119, 0.0
    %v123 = vpack.c.bf16 %v122, %v122
    %v124 = vld [vmem:[#allocation7] sm:$0xf]
    %v125 = vld [vmem:[#allocation7 + $0x4] sm:$0xf]
    %v126 = vld [vmem:[#allocation7 + $0x8] sm:$0xf]
    %v127 = vld [vmem:[#allocation7 + $0xc] sm:$0xf]
    %v128 = vld [vmem:[#allocation7 + $0x10] sm:$0xf]
    %v129 = vld [vmem:[#allocation7 + $0x14] sm:$0xf]
    %v130 = vld [vmem:[#allocation7 + $0x18] sm:$0xf]
    %v131 = vld [vmem:[#allocation7 + $0x1c] sm:$0xf]
    %v132 = vld [vmem:[#allocation7 + $0x20] sm:$0xf]
    %v133 = vld [vmem:[#allocation7 + $0x24] sm:$0xf]
    %v134 = vld [vmem:[#allocation7 + $0x28] sm:$0xf]
    %v135 = vld [vmem:[#allocation7 + $0x2c] sm:$0xf]
    %v136 = vld [vmem:[#allocation7 + $0x30] sm:$0xf]
    %v137 = vld [vmem:[#allocation7 + $0x34] sm:$0xf]
    %v138 = vld [vmem:[#allocation7 + $0x38] sm:$0xf]
    %v139 = vld [vmem:[#allocation7 + $0x3c] sm:$0xf]
    %v140 = vld [vmem:[%s4] sm:$0x1]
    %v142 = vperm.slane %v140, 0
    %v160 = vunpack.c.l.b16 %v124
    %v161 = vunpack.c.l.b16 %v125
    %v162 = vunpack.c.l.b16 %v126
    %v163 = vunpack.c.l.b16 %v127
    %v164 = vunpack.c.l.b16 %v128
    %v165 = vunpack.c.l.b16 %v129
    %v166 = vunpack.c.l.b16 %v130
    %v167 = vunpack.c.l.b16 %v131
    %v168 = vunpack.c.l.b16 %v132
    %v169 = vunpack.c.l.b16 %v133
    %v170 = vunpack.c.l.b16 %v134
    %v171 = vunpack.c.l.b16 %v135
    %v172 = vunpack.c.l.b16 %v136
    %v173 = vunpack.c.l.b16 %v137
    %v174 = vunpack.c.l.b16 %v138
    %v175 = vunpack.c.l.b16 %v139
    %v176 = vpack.c.b16 %v161, %v160
    %v177 = vpack.c.b16 %v163, %v162
    %v178 = vpack.c.b16 %v165, %v164
    %v179 = vpack.c.b16 %v167, %v166
    %v180 = vpack.c.b16 %v169, %v168
    %v181 = vpack.c.b16 %v171, %v170
    %v182 = vpack.c.b16 %v173, %v172
    %v183 = vpack.c.b16 %v175, %v174
    %192 = vmatpush.bf16.msra.mxu0 %v183
    %193 = vmatpush.bf16.msra.mxu0 %v182
    %194 = vmatpush.bf16.msra.mxu0 %v181
    %195 = vmatpush.bf16.msra.mxu0 %v180
    %196 = vmatpush.bf16.msra.mxu0 %v179
    %197 = vmatpush.bf16.msra.mxu0 %v178
    %198 = vmatpush.bf16.msra.mxu0 %v177
    %199 = vmatpush.bf16.msra.mxu0 %v176
    %200 = vmatmul.bf16.gmra.mxu0 %v123
    %v201 = vpop.f32.mrf.mxu0
    %v202 = vadd.f32 %v142, %v201
    %v203 = vpop.f32.mrf.mxu0
    %204 = vdwg.mxu0
    %205 = vst [vmem:[#allocation8] sm:$0xff] %v202
    // Predicated region
    $region34: #{tpu_custom_call.1} parent=1 // pred_check
      _
    $region35: #{tpu_custom_call.1} parent=1 // pred_check_branch
      %207 = sbr.rel (0) target = $region37
    $region36: #{tpu_custom_call.1} parent=1 // pred_region
      %209 = vsyncadd [#allocation4], 0
      %s211 = sshll.u32 [#allocation8], 4
      %s212 = int_to_ptr.vmem [resolvable:$true] %s211
      %s213 = sshll.u32 %s5, 4
      %s214 = int_to_ptr.hbm [resolvable:$true] %s213
      %216 = dma.vmem_to_hbm [thread:$0]  %s212, 128, %s214, [#allocation4]
    $region37: #{tpu_custom_call.1} parent=1 // pred_fallthru
      _
    // Predicated region
    $region38: #{tpu_custom_call.1} parent=1 // pred_check
      _
    $region39: #{tpu_custom_call.1} parent=1 // pred_check_branch
      %218 = sbr.rel (0) target = $region41
    $region40: #{tpu_custom_call.1} parent=1 // pred_region
      %220 = dma.done [#allocation4], 128
    $region41: #{tpu_custom_call.1} parent=1 // pred_fallthru
      _
    %221 = vsyncpa [#allocation3], 1
    %222 = vsyncpa [#allocation6], 1
    %223 = vsyncpa [#allocation4], 1

</llo_original>
